<compile_context>
chip_gen: v7x
topology: tpu7x:2x2x1
jax: 0.10.0
libtpu: 0.0.40
codegen_flags: <defaults>
</compile_context>

<pallas_src>
import jax
import jax.numpy as jnp
from jax.experimental import pallas as pl
from jax.experimental.pallas import tpu as pltpu

NUM_STATE = 4        # CartPole-v1 observation dim
NUM_ACTION = 2       # CartPole-v1 action dim
NUM_ACTION_PAD = 8   # fc3 rows padded to a full sublane tile -> dense stores
HIDDEN = 32


def _round_up(n, m):
    return ((n + m - 1) // m) * m


def _net_kernel(x_ref, w1_ref, b1_ref, w2_ref, b2_ref, w3_ref, b3_ref, out_ref):
    x = x_ref[...]                                                   # [NUM_STATE, TB] bf16
    # fc1 + ReLU : bf16 MXU matmul, f32 accumulate, f32 bias/ReLU
    h1 = jnp.dot(w1_ref[...], x, preferred_element_type=jnp.float32) + b1_ref[...]
    h1 = jnp.maximum(h1, 0.0).astype(jnp.bfloat16)                   # [HIDDEN, TB]
    # fc2 + ReLU
    h2 = jnp.dot(w2_ref[...], h1, preferred_element_type=jnp.float32) + b2_ref[...]
    h2 = jnp.maximum(h2, 0.0).astype(jnp.bfloat16)                   # [HIDDEN, TB]
    # fc3 (output rows padded to 8 -> unmasked dense store)
    out = jnp.dot(w3_ref[...], h2, preferred_element_type=jnp.float32) + b3_ref[...]
    out_ref[...] = out                                               # [NUM_ACTION_PAD, TB] f32


def _choose_tiles(batch, block_b, min_tiles):
    """Pick a 128-aligned lane tile `tb` and padded batch so that
    (a) there are at least `min_tiles` grid steps (2-TC split on v7x), and
    (b) padding waste stays bounded (~<=128 columns per tile)."""
    n = max(pl.cdiv(batch, block_b), min_tiles)
    tb = min(block_b, _round_up(pl.cdiv(batch, n), 128))
    n = pl.cdiv(batch, tb)
    return tb, n * tb


def _net_pallas(x_t, kp, tb):
    """x_t: [NUM_STATE, b_pad] bf16, batch on lanes, b_pad % tb == 0.
    Returns [NUM_ACTION_PAD, b_pad] f32 (extra rows / padded columns are
    sliced off by the callers)."""
    b_pad = x_t.shape[1]
    grid = (b_pad // tb,)
    return pl.pallas_call(
        _net_kernel,
        out_shape=jax.ShapeDtypeStruct((NUM_ACTION_PAD, b_pad), jnp.float32),
        grid=grid,
        in_specs=[
            # x: tiled along the lane (batch) axis -> double-buffered pipeline
            pl.BlockSpec((NUM_STATE, tb), lambda i: (0, i)),
            # weights & biases: constant block index -> fetched once, resident in VMEM
            pl.BlockSpec((HIDDEN, NUM_STATE), lambda i: (0, 0)),
            pl.BlockSpec((HIDDEN, 1), lambda i: (0, 0)),
            pl.BlockSpec((HIDDEN, HIDDEN), lambda i: (0, 0)),
            pl.BlockSpec((HIDDEN, 1), lambda i: (0, 0)),
            pl.BlockSpec((NUM_ACTION_PAD, HIDDEN), lambda i: (0, 0)),
            pl.BlockSpec((NUM_ACTION_PAD, 1), lambda i: (0, 0)),
        ],
        out_specs=pl.BlockSpec((NUM_ACTION_PAD, tb), lambda i: (0, i)),
        compiler_params=pltpu.CompilerParams(
            # Batch tiles are independent -> shard grid steps across TCs (v7x).
            dimension_semantics=("parallel",),
        ),
    )(x_t, kp["w1"], kp["b1"], kp["w2"], kp["b2"], kp["w3"], kp["b3"])


def prepare_params(p):
    """One-time conversion of PyTorch-layout f32 params into kernel form:
    bf16 weights (MXU-native), f32 biases [out, 1], fc3 padded to 8 rows."""
    w3p = jnp.zeros((NUM_ACTION_PAD, HIDDEN), jnp.float32).at[:NUM_ACTION].set(p["w3"])
    b3p = jnp.zeros((NUM_ACTION_PAD, 1), jnp.float32).at[:NUM_ACTION].set(p["b3"])
    return {
        "w1": p["w1"].astype(jnp.bfloat16), "b1": p["b1"].astype(jnp.float32),
        "w2": p["w2"].astype(jnp.bfloat16), "b2": p["b2"].astype(jnp.float32),
        "w3": w3p.astype(jnp.bfloat16),     "b3": b3p,
    }


def net_forward_lanes(x_t, kparams, *, block_b=4096, min_tiles=None):
    """Lane-dense entry point: x_t is [NUM_STATE, B] (batch already on the
    lane axis). Returns [NUM_ACTION, B] f32. Preferred path when the caller
    keeps activations feature-major (no wrapper transposes at all)."""
    B = x_t.shape[1]
    if min_tiles is None:
        min_tiles = 2 if B >= 256 else 1
    tb, b_pad = _choose_tiles(B, block_b, min_tiles)
    if b_pad != B:
        x_t = jnp.pad(x_t, ((0, 0), (0, b_pad - B)))
    out_t = _net_pallas(x_t.astype(jnp.bfloat16), kparams, tb)
    return out_t[:NUM_ACTION, :B]


def net_forward(x, kparams, *, block_b=4096, min_tiles=None):
    """PyTorch-interface wrapper: x [B, NUM_STATE] f32 -> [B, NUM_ACTION] f32.
    pad + transpose + bf16-cast is a single fused XLA expression feeding the
    kernel; use `net_forward_lanes` to skip the transposes entirely."""
    B = x.shape[0]
    if min_tiles is None:
        min_tiles = 2 if B >= 256 else 1
    tb, b_pad = _choose_tiles(B, block_b, min_tiles)
    x_t = jnp.pad(x, ((0, b_pad - B), (0, 0))).T.astype(jnp.bfloat16)
    out_t = _net_pallas(x_t, kparams, tb)            # [NUM_ACTION_PAD, b_pad]
    return out_t[:NUM_ACTION, :B].T                  # [B, NUM_ACTION]


def init_params(key):
    """PyTorch nn.Linear default init (U(+-1/sqrt(fan_in))), PyTorch layout
    [out_features, in_features]; biases stored as [out_features, 1] so they
    broadcast along the lane (batch) axis in-kernel."""
    ks = jax.random.split(key, 6)

    def linear(kw, kb, fan_in, fan_out):
        bound = 1.0 / jnp.sqrt(jnp.float32(fan_in))
        w = jax.random.uniform(kw, (fan_out, fan_in), jnp.float32, -bound, bound)
        b = jax.random.uniform(kb, (fan_out, 1), jnp.float32, -bound, bound)
        return w, b

    w1, b1 = linear(ks[0], ks[1], NUM_STATE, HIDDEN)
    w2, b2 = linear(ks[2], ks[3], HIDDEN, HIDDEN)
    w3, b3 = linear(ks[4], ks[5], HIDDEN, NUM_ACTION)
    return {"w1": w1, "b1": b1, "w2": w2, "b2": b2, "w3": w3, "b3": b3}


def net_forward_ref(x, p):
    """Pure-JAX reference with the kernel's numerics (bf16 matmul operands,
    f32 accumulation, f32 bias/ReLU). PyTorch Linear semantics: y = x W^T + b."""
    bf = jnp.bfloat16
    h1 = jnp.dot(x.astype(bf), p["w1"].T.astype(bf),
                 preferred_element_type=jnp.float32) + p["b1"].T
    h1 = jnp.maximum(h1, 0.0)
    h2 = jnp.dot(h1.astype(bf), p["w2"].T.astype(bf),
                 preferred_element_type=jnp.float32) + p["b2"].T
    h2 = jnp.maximum(h2, 0.0)
    return jnp.dot(h2.astype(bf), p["w3"].T.astype(bf),
                   preferred_element_type=jnp.float32) + p["b3"].T


if __name__ == "__main__":
    key = jax.random.PRNGKey(0)
    kx, kp, kx2 = jax.random.split(key, 3)
    params = init_params(kp)
    kparams = prepare_params(params)

    # Small action-selection style batch (matches the PyTorch module usage).
    batch = 2
    x = jax.random.normal(kx, (batch, NUM_STATE), dtype=jnp.float32)
    out = jax.block_until_ready(net_forward(x, kparams))
    ref = net_forward_ref(x, params)
    assert out.shape == (batch, NUM_ACTION)
    assert jnp.allclose(out, ref, atol=1e-4, rtol=1e-4)

    # Larger, non-aligned batch exercising the multi-tile (>=2 grid steps)
    # path and the zero-transpose lane-dense entry point.
    batch2 = 300
    x2 = jax.random.normal(kx2, (batch2, NUM_STATE), dtype=jnp.float32)
    out2 = jax.block_until_ready(net_forward(x2, kparams))
    out2_lanes = jax.block_until_ready(net_forward_lanes(x2.T, kparams))
    ref2 = net_forward_ref(x2, params)
    assert out2.shape == (batch2, NUM_ACTION)
    assert jnp.allclose(out2, ref2, atol=1e-4, rtol=1e-4)
    assert jnp.allclose(out2_lanes.T, ref2, atol=1e-4, rtol=1e-4)

    print("KERNEL_OK")
</pallas_src>

<mosaic_0001>
module attributes {stable_mosaic.version = 11 : i64} {
  func.func @_net_kernel(%arg0: i32, %arg1: memref<4x128xbf16, #tpu.memory_space<vmem>>, %arg2: memref<32x4xbf16, #tpu.memory_space<vmem>>, %arg3: memref<32x1xf32, #tpu.memory_space<vmem>>, %arg4: memref<32x32xbf16, #tpu.memory_space<vmem>>, %arg5: memref<32x1xf32, #tpu.memory_space<vmem>>, %arg6: memref<8x32xbf16, #tpu.memory_space<vmem>>, %arg7: memref<8x1xf32, #tpu.memory_space<vmem>>, %arg8: memref<8x128xf32, #tpu.memory_space<vmem>>) attributes {dimension_semantics = [#tpu.dimension_semantics<parallel>], iteration_bounds = array<i64: 1>, scalar_prefetch = 0 : i64, scratch_operands = 0 : i64, tpu.core_type = #tpu.core_type<tc>, window_params = [{transform_indices = @transform_0, window_bounds = array<i64: 4, 128>}, {pipeline_mode = #tpu.pipeline_mode<synchronous>, transform_indices = @transform_1, window_bounds = array<i64: 32, 4>}, {pipeline_mode = #tpu.pipeline_mode<synchronous>, transform_indices = @transform_2, window_bounds = array<i64: 32, 1>}, {pipeline_mode = #tpu.pipeline_mode<synchronous>, transform_indices = @transform_3, window_bounds = array<i64: 32, 32>}, {pipeline_mode = #tpu.pipeline_mode<synchronous>, transform_indices = @transform_4, window_bounds = array<i64: 32, 1>}, {pipeline_mode = #tpu.pipeline_mode<synchronous>, transform_indices = @transform_5, window_bounds = array<i64: 8, 32>}, {pipeline_mode = #tpu.pipeline_mode<synchronous>, transform_indices = @transform_6, window_bounds = array<i64: 8, 1>}, {transform_indices = @transform_7, window_bounds = array<i64: 8, 128>}]} {
    %c0 = arith.constant 0 : index
    %c0_0 = arith.constant 0 : index
    %0 = vector.load %arg1[%c0, %c0_0] : memref<4x128xbf16, #tpu.memory_space<vmem>>, vector<4x128xbf16>
    %c0_1 = arith.constant 0 : index
    %c0_2 = arith.constant 0 : index
    %1 = vector.load %arg2[%c0_1, %c0_2] : memref<32x4xbf16, #tpu.memory_space<vmem>>, vector<32x4xbf16>
    %cst = arith.constant dense<0.000000e+00> : vector<32x128xf32>
    %2 = tpu.matmul %1, %0, %cst {dimension_numbers = #tpu.dot_dimension_numbers<[1], [0], [0], [1], [0, 0, 1, 1], [], []>} : vector<32x4xbf16>, vector<4x128xbf16>, vector<32x128xf32> -> vector<32x128xf32>
    %c0_3 = arith.constant 0 : index
    %c0_4 = arith.constant 0 : index
    %3 = vector.load %arg3[%c0_3, %c0_4] : memref<32x1xf32, #tpu.memory_space<vmem>>, vector<32x1xf32>
    %4 = vector.broadcast %3 : vector<32x1xf32> to vector<32x128xf32>
    %5 = arith.addf %2, %4 : vector<32x128xf32>
    %cst_5 = arith.constant 0.000000e+00 : f32
    %6 = vector.broadcast %cst_5 : f32 to vector<32x128xf32>
    %7 = arith.maximumf %5, %6 : vector<32x128xf32>
    %8 = arith.truncf %7 : vector<32x128xf32> to vector<32x128xbf16>
    %c0_6 = arith.constant 0 : index
    %c0_7 = arith.constant 0 : index
    %9 = vector.load %arg4[%c0_6, %c0_7] : memref<32x32xbf16, #tpu.memory_space<vmem>>, vector<32x32xbf16>
    %cst_8 = arith.constant dense<0.000000e+00> : vector<32x128xf32>
    %10 = tpu.matmul %9, %8, %cst_8 {dimension_numbers = #tpu.dot_dimension_numbers<[1], [0], [0], [1], [0, 0, 1, 1], [], []>} : vector<32x32xbf16>, vector<32x128xbf16>, vector<32x128xf32> -> vector<32x128xf32>
    %c0_9 = arith.constant 0 : index
    %c0_10 = arith.constant 0 : index
    %11 = vector.load %arg5[%c0_9, %c0_10] : memref<32x1xf32, #tpu.memory_space<vmem>>, vector<32x1xf32>
    %12 = vector.broadcast %11 : vector<32x1xf32> to vector<32x128xf32>
    %13 = arith.addf %10, %12 : vector<32x128xf32>
    %cst_11 = arith.constant 0.000000e+00 : f32
    %14 = vector.broadcast %cst_11 : f32 to vector<32x128xf32>
    %15 = arith.maximumf %13, %14 : vector<32x128xf32>
    %16 = arith.truncf %15 : vector<32x128xf32> to vector<32x128xbf16>
    %c0_12 = arith.constant 0 : index
    %c0_13 = arith.constant 0 : index
    %17 = vector.load %arg6[%c0_12, %c0_13] : memref<8x32xbf16, #tpu.memory_space<vmem>>, vector<8x32xbf16>
    %cst_14 = arith.constant dense<0.000000e+00> : vector<8x128xf32>
    %18 = tpu.matmul %17, %16, %cst_14 {dimension_numbers = #tpu.dot_dimension_numbers<[1], [0], [0], [1], [0, 0, 1, 1], [], []>} : vector<8x32xbf16>, vector<32x128xbf16>, vector<8x128xf32> -> vector<8x128xf32>
    %c0_15 = arith.constant 0 : index
    %c0_16 = arith.constant 0 : index
    %19 = vector.load %arg7[%c0_15, %c0_16] : memref<8x1xf32, #tpu.memory_space<vmem>>, vector<8x1xf32>
    %20 = vector.broadcast %19 : vector<8x1xf32> to vector<8x128xf32>
    %21 = arith.addf %18, %20 : vector<8x128xf32>
    %c0_17 = arith.constant 0 : index
    %c0_18 = arith.constant 0 : index
    %22 = vector.load %arg8[%c0_17, %c0_18] : memref<8x128xf32, #tpu.memory_space<vmem>>, vector<8x128xf32>
    tpu.vector_store %arg8[%c0_17, %c0_18], %21 {strides = array<i32>} : memref<8x128xf32, #tpu.memory_space<vmem>>, vector<8x128xf32>,
    return
  }
  func.func @transform_0(%arg0: i32) -> (i32, i32) {
    %c0_i32 = arith.constant 0 : i32
    %c0_i32_0 = arith.constant 0 : i32
    return %c0_i32, %arg0 : i32, i32
  }
  func.func @transform_1(%arg0: i32) -> (i32, i32) {
    %c0_i32 = arith.constant 0 : i32
    %c0_i32_0 = arith.constant 0 : i32
    %c0_i32_1 = arith.constant 0 : i32
    return %c0_i32, %c0_i32_0 : i32, i32
  }
  func.func @transform_2(%arg0: i32) -> (i32, i32) {
    %c0_i32 = arith.constant 0 : i32
    %c0_i32_0 = arith.constant 0 : i32
    %c0_i32_1 = arith.constant 0 : i32
    return %c0_i32, %c0_i32_0 : i32, i32
  }
  func.func @transform_3(%arg0: i32) -> (i32, i32) {
    %c0_i32 = arith.constant 0 : i32
    %c0_i32_0 = arith.constant 0 : i32
    %c0_i32_1 = arith.constant 0 : i32
    return %c0_i32, %c0_i32_0 : i32, i32
  }
  func.func @transform_4(%arg0: i32) -> (i32, i32) {
    %c0_i32 = arith.constant 0 : i32
    %c0_i32_0 = arith.constant 0 : i32
    %c0_i32_1 = arith.constant 0 : i32
    return %c0_i32, %c0_i32_0 : i32, i32
  }
  func.func @transform_5(%arg0: i32) -> (i32, i32) {
    %c0_i32 = arith.constant 0 : i32
    %c0_i32_0 = arith.constant 0 : i32
    %c0_i32_1 = arith.constant 0 : i32
    return %c0_i32, %c0_i32_0 : i32, i32
  }
  func.func @transform_6(%arg0: i32) -> (i32, i32) {
    %c0_i32 = arith.constant 0 : i32
    %c0_i32_0 = arith.constant 0 : i32
    %c0_i32_1 = arith.constant 0 : i32
    return %c0_i32, %c0_i32_0 : i32, i32
  }
  func.func @transform_7(%arg0: i32) -> (i32, i32) {
    %c0_i32 = arith.constant 0 : i32
    %c0_i32_0 = arith.constant 0 : i32
    return %c0_i32, %arg0 : i32, i32
  }
}

</mosaic_0001>

<llo_original>
// kernel: tpu_custom_call.1
$region0: #{tpu_custom_call.1}
  #allocation0 [shape = 'u32[]', space=smem, size = 0x4, offset = 0x4, fixed_abs, tag = 'smem constant byte address 0x4 - core index']
  #allocation1 [shape = 'u32[144,128]{1,0:T(1,128)}', space=vmem, size = 0x12000, scoped, tag = 'internal scratch']
  %s0 = inlined_call_operand.vmem [shape: bf16[4,128], index: 0, kind: input, shape index: {}]
  %s1 = inlined_call_operand.vmem [shape: bf16[32,4], index: 1, kind: input, shape index: {}]
  %s2 = inlined_call_operand.vmem [shape: f32[32,1], index: 2, kind: input, shape index: {}]
  %s3 = inlined_call_operand.vmem [shape: bf16[32,32], index: 3, kind: input, shape index: {}]
  %s4 = inlined_call_operand.vmem [shape: f32[32,1], index: 4, kind: input, shape index: {}]
  %s5 = inlined_call_operand.vmem [shape: bf16[8,32], index: 5, kind: input, shape index: {}]
  %s6 = inlined_call_operand.vmem [shape: f32[8,1], index: 6, kind: input, shape index: {}]
  %s7 = inlined_call_operand.hbm [shape: f32[8,128], index: 7, kind: output, shape index: {}]
  %s8 = sld [smem:[#allocation0]]
  $region38: #{tpu_custom_call.1} parent=0
    _
  %s10 = ssub.s32 1, %s8
  %s11 = scalar_select 0, %s10, %s8
  $region1: #{tpu_custom_call.1} parent=0
    #allocation2 [shape = 'u8[4096]{0}', space=vmem, size = 0x1000, scoped, tag = 'output window, operand 0, single buffered']
    #allocation3 [shape = 's32[1]{0}', space=sflag, size = 0x4, scoped, tag = 'scoped memory for tpu_custom_call.1']
    %12 = vsyncpa [#allocation3], 0
    // Predicated region
    $region2: #{tpu_custom_call.1} parent=1 // pred_check
      _
    $region3: #{tpu_custom_call.1} parent=1 // pred_check_branch
      %14 = sbr.rel (0) target = $region5
    $region4: #{tpu_custom_call.1} parent=1 // pred_region
      _
    $region5: #{tpu_custom_call.1} parent=1 // pred_fallthru
      _
    // Predicated region
    $region6: #{tpu_custom_call.1} parent=1 // pred_check
      _
    $region7: #{tpu_custom_call.1} parent=1 // pred_check_branch
      %16 = sbr.rel (0) target = $region9
    $region8: #{tpu_custom_call.1} parent=1 // pred_region
      _
    $region9: #{tpu_custom_call.1} parent=1 // pred_fallthru
      _
    // Predicated region
    $region10: #{tpu_custom_call.1} parent=1 // pred_check
      _
    $region11: #{tpu_custom_call.1} parent=1 // pred_check_branch
      %18 = sbr.rel (0) target = $region13
    $region12: #{tpu_custom_call.1} parent=1 // pred_region
      _
    $region13: #{tpu_custom_call.1} parent=1 // pred_fallthru
      _
    // Predicated region
    $region14: #{tpu_custom_call.1} parent=1 // pred_check
      _
    $region15: #{tpu_custom_call.1} parent=1 // pred_check_branch
      %20 = sbr.rel (0) target = $region17
    $region16: #{tpu_custom_call.1} parent=1 // pred_region
      _
    $region17: #{tpu_custom_call.1} parent=1 // pred_fallthru
      _
    // Predicated region
    $region18: #{tpu_custom_call.1} parent=1 // pred_check
      _
    $region19: #{tpu_custom_call.1} parent=1 // pred_check_branch
      %22 = sbr.rel (0) target = $region21
    $region20: #{tpu_custom_call.1} parent=1 // pred_region
      _
    $region21: #{tpu_custom_call.1} parent=1 // pred_fallthru
      _
    // Predicated region
    $region22: #{tpu_custom_call.1} parent=1 // pred_check
      _
    $region23: #{tpu_custom_call.1} parent=1 // pred_check_branch
      %24 = sbr.rel (0) target = $region25
    $region24: #{tpu_custom_call.1} parent=1 // pred_region
      _
    $region25: #{tpu_custom_call.1} parent=1 // pred_fallthru
      _
    // Predicated region
    $region26: #{tpu_custom_call.1} parent=1 // pred_check
      _
    $region27: #{tpu_custom_call.1} parent=1 // pred_check_branch
      %26 = sbr.rel (0) target = $region29
    $region28: #{tpu_custom_call.1} parent=1 // pred_region
      _
    $region29: #{tpu_custom_call.1} parent=1 // pred_fallthru
      _
    %v28 = vld [vmem:[%s0] sm:$0x3]
    %v29 = vld [vmem:[%s1] sm:$0xf]
    %v30 = vld [vmem:[%s1 + $0x4] sm:$0xf]
    %v31 = vld [vmem:[%s1 + $0x8] sm:$0xf]
    %v32 = vld [vmem:[%s1 + $0xc] sm:$0xf]
    %v33 = vld [vmem:[%s2] sm:$0xff]
    %v34 = vld [vmem:[%s2 + $0x8] sm:$0xff]
    %v35 = vld [vmem:[%s2 + $0x10] sm:$0xff]
    %v36 = vld [vmem:[%s2 + $0x18] sm:$0xff]
    %38 = vset.pattern.permute.xlu0 0
    %39 = vperm.xlu0 %38, %v33
    %v40 = vpop.permute.xlu0 %39
    %43 = vset.pattern.permute.xlu0 0
    %44 = vperm.xlu0 %43, %v34
    %v45 = vpop.permute.xlu0 %44
    %48 = vset.pattern.permute.xlu0 0
    %49 = vperm.xlu0 %48, %v35
    %v50 = vpop.permute.xlu0 %49
    %53 = vset.pattern.permute.xlu0 0
    %54 = vperm.xlu0 %53, %v36
    %v55 = vpop.permute.xlu0 %54
    %v61 = vunpack.c.l.b16 %v29
    %v62 = vunpack.c.l.b16 %v30
    %v63 = vunpack.c.l.b16 %v31
    %v64 = vunpack.c.l.b16 %v32
    %v65 = vpack.c.b16 %v62, %v61
    %v66 = vpack.c.b16 %v64, %v63
    %vm67 = vcmask 31744
    %v69 = vsel %vm67, %v65, 0
    %v72 = vsel %vm67, %v66, 0
    %vm74 = vcmask 1041408
    %v76 = vsel %vm74, %v28, 0
    %78 = vmatprep.subr.bf16.mxu0 0
    %79 = vmatpush1.bf16.msra.mxu0 %v76
    %80 = vmatprep.subr.bf16.mxu0 0
    %81 = vmatpush1.bf16.msra.mxu0 0
    %82 = vmatprep.subr.bf16.mxu0 0
    %83 = vmatpush1.bf16.msra.mxu0 0
    %84 = vmatprep.subr.bf16.mxu0 0
    %85 = vmatpush1.bf16.msra.mxu0 0
    %86 = vmatprep.subr.bf16.mxu0 0
    %87 = vmatpush1.bf16.msra.mxu0 0
    %88 = vmatprep.subr.bf16.mxu0 0
    %89 = vmatpush1.bf16.msra.mxu0 0
    %90 = vmatprep.subr.bf16.mxu0 0
    %91 = vmatpush1.bf16.msra.mxu0 0
    %92 = vmatprep.subr.bf16.mxu0 0
    %93 = vmatpush1.bf16.msra.mxu0 0
    %94 = vmatprep.subr.bf16.mxu0 0
    %95 = vmatpush1.bf16.msra.mxu0 0
    %96 = vmatprep.subr.bf16.mxu0 0
    %97 = vmatpush1.bf16.msra.mxu0 0
    %98 = vmatprep.subr.bf16.mxu0 0
    %99 = vmatpush1.bf16.msra.mxu0 0
    %100 = vmatprep.subr.bf16.mxu0 0
    %101 = vmatpush1.bf16.msra.mxu0 0
    %102 = vmatprep.subr.bf16.mxu0 0
    %103 = vmatpush1.bf16.msra.mxu0 0
    %104 = vmatprep.subr.bf16.mxu0 0
    %105 = vmatpush1.bf16.msra.mxu0 0
    %106 = vmatprep.subr.bf16.mxu0 0
    %107 = vmatpush1.bf16.msra.mxu0 0
    %108 = vmatprep.subr.bf16.mxu0 0
    %109 = vmatpush1.bf16.msra.mxu0 0
    %110 = vmatprep.mubr.bf16.mxu0 0
    %111 = vmatmul.mubr.bf16.gmra.mrb[0].mxu0 %v69
    %v112 = vpop.f32.mrb[0].mxu0
    %v113 = vadd.f32 %v40, %v112
    %v114 = vpop.f32.mrb[0].mxu0
    %v115 = vpop.f32.mrb[0].mxu0
    %v116 = vadd.f32 %v45, %v115
    %v117 = vpop.f32.mrb[0].mxu0
    %118 = vmatprep.mubr.bf16.mxu0 0
    %119 = vmatmul.mubr.bf16.gmra.mrb[0].mxu0 %v72
    %v120 = vpop.f32.mrb[0].mxu0
    %v121 = vadd.f32 %v50, %v120
    %v122 = vpop.f32.mrb[0].mxu0
    %v123 = vpop.f32.mrb[0].mxu0
    %v124 = vadd.f32 %v55, %v123
    %v125 = vpop.f32.mrb[0].mxu0
    %126 = vdwg.mxu0
    %v127 = vmax.f32 %v113, 0.0
    %v128 = vmax.f32 %v116, 0.0
    %v129 = vmax.f32 %v121, 0.0
    %v130 = vmax.f32 %v124, 0.0
    %v131 = vpack.c.bf16 %v128, %v127
    %v132 = vpack.c.bf16 %v130, %v129
    %v133 = vld [vmem:[%s3] sm:$0xf]
    %v134 = vld [vmem:[%s3 + $0x4] sm:$0xf]
    %v135 = vld [vmem:[%s3 + $0x8] sm:$0xf]
    %v136 = vld [vmem:[%s3 + $0xc] sm:$0xf]
    %v137 = vld [vmem:[%s4] sm:$0xff]
    %v138 = vld [vmem:[%s4 + $0x8] sm:$0xff]
    %v139 = vld [vmem:[%s4 + $0x10] sm:$0xff]
    %v140 = vld [vmem:[%s4 + $0x18] sm:$0xff]
    %142 = vset.pattern.permute.xlu0 0
    %143 = vperm.xlu0 %142, %v137
    %v144 = vpop.permute.xlu0 %143
    %147 = vset.pattern.permute.xlu0 0
    %148 = vperm.xlu0 %147, %v138
    %v149 = vpop.permute.xlu0 %148
    %152 = vset.pattern.permute.xlu0 0
    %153 = vperm.xlu0 %152, %v139
    %v154 = vpop.permute.xlu0 %153
    %157 = vset.pattern.permute.xlu0 0
    %158 = vperm.xlu0 %157, %v140
    %v159 = vpop.permute.xlu0 %158
    %v165 = vunpack.c.l.b16 %v133
    %v166 = vunpack.c.l.b16 %v134
    %v167 = vunpack.c.l.b16 %v135
    %v168 = vunpack.c.l.b16 %v136
    %v169 = vpack.c.b16 %v166, %v165
    %v170 = vpack.c.b16 %v168, %v167
    %vm171 = vcmask 261120
    %v173 = vsel %vm171, %v169, 0
    %v176 = vsel %vm171, %v170, 0
    %178 = vmatprep.subr.bf16.mxu0 0
    %179 = vmatpush1.bf16.msra.mxu0 %v131
    %180 = vmatprep.subr.bf16.mxu0 0
    %181 = vmatpush1.bf16.msra.mxu0 %v132
    %182 = vmatprep.subr.bf16.mxu0 0
    %183 = vmatpush1.bf16.msra.mxu0 0
    %184 = vmatprep.subr.bf16.mxu0 0
    %185 = vmatpush1.bf16.msra.mxu0 0
    %186 = vmatprep.subr.bf16.mxu0 0
    %187 = vmatpush1.bf16.msra.mxu0 0
    %188 = vmatprep.subr.bf16.mxu0 0
    %189 = vmatpush1.bf16.msra.mxu0 0
    %190 = vmatprep.subr.bf16.mxu0 0
    %191 = vmatpush1.bf16.msra.mxu0 0
    %192 = vmatprep.subr.bf16.mxu0 0
    %193 = vmatpush1.bf16.msra.mxu0 0
    %194 = vmatprep.subr.bf16.mxu0 0
    %195 = vmatpush1.bf16.msra.mxu0 0
    %196 = vmatprep.subr.bf16.mxu0 0
    %197 = vmatpush1.bf16.msra.mxu0 0
    %198 = vmatprep.subr.bf16.mxu0 0
    %199 = vmatpush1.bf16.msra.mxu0 0
    %200 = vmatprep.subr.bf16.mxu0 0
    %201 = vmatpush1.bf16.msra.mxu0 0
    %202 = vmatprep.subr.bf16.mxu0 0
    %203 = vmatpush1.bf16.msra.mxu0 0
    %204 = vmatprep.subr.bf16.mxu0 0
    %205 = vmatpush1.bf16.msra.mxu0 0
    %206 = vmatprep.subr.bf16.mxu0 0
    %207 = vmatpush1.bf16.msra.mxu0 0
    %208 = vmatprep.subr.bf16.mxu0 0
    %209 = vmatpush1.bf16.msra.mxu0 0
    %210 = vmatprep.mubr.bf16.mxu0 0
    %211 = vmatmul.mubr.bf16.gmra.mrb[0].mxu0 %v173
    %v212 = vpop.f32.mrb[0].mxu0
    %v213 = vadd.f32 %v144, %v212
    %v214 = vpop.f32.mrb[0].mxu0
    %v215 = vpop.f32.mrb[0].mxu0
    %v216 = vadd.f32 %v149, %v215
    %v217 = vpop.f32.mrb[0].mxu0
    %218 = vmatprep.mubr.bf16.mxu0 0
    %219 = vmatmul.mubr.bf16.gmra.mrb[0].mxu0 %v176
    %v220 = vpop.f32.mrb[0].mxu0
    %v221 = vadd.f32 %v154, %v220
    %v222 = vpop.f32.mrb[0].mxu0
    %v223 = vpop.f32.mrb[0].mxu0
    %v224 = vadd.f32 %v159, %v223
    %v225 = vpop.f32.mrb[0].mxu0
    %226 = vdwg.mxu0
    %v227 = vmax.f32 %v213, 0.0
    %v228 = vmax.f32 %v216, 0.0
    %v229 = vmax.f32 %v221, 0.0
    %v230 = vmax.f32 %v224, 0.0
    %v231 = vpack.c.bf16 %v228, %v227
    %v232 = vpack.c.bf16 %v230, %v229
    %v233 = vld [vmem:[%s5] sm:$0xf]
    %v234 = vld [vmem:[%s6] sm:$0xff]
    %236 = vset.pattern.permute.xlu0 0
    %237 = vperm.xlu0 %236, %v234
    %v238 = vpop.permute.xlu0 %237
    %v241 = vsel %vm171, %v233, 0
    %243 = vmatprep.subr.bf16.mxu0 0
    %244 = vmatpush1.bf16.msra.mxu0 %v231
    %245 = vmatprep.subr.bf16.mxu0 0
    %246 = vmatpush1.bf16.msra.mxu0 %v232
    %247 = vmatprep.subr.bf16.mxu0 0
    %248 = vmatpush1.bf16.msra.mxu0 0
    %249 = vmatprep.subr.bf16.mxu0 0
    %250 = vmatpush1.bf16.msra.mxu0 0
    %251 = vmatprep.subr.bf16.mxu0 0
    %252 = vmatpush1.bf16.msra.mxu0 0
    %253 = vmatprep.subr.bf16.mxu0 0
    %254 = vmatpush1.bf16.msra.mxu0 0
    %255 = vmatprep.subr.bf16.mxu0 0
    %256 = vmatpush1.bf16.msra.mxu0 0
    %257 = vmatprep.subr.bf16.mxu0 0
    %258 = vmatpush1.bf16.msra.mxu0 0
    %259 = vmatprep.subr.bf16.mxu0 0
    %260 = vmatpush1.bf16.msra.mxu0 0
    %261 = vmatprep.subr.bf16.mxu0 0
    %262 = vmatpush1.bf16.msra.mxu0 0
    %263 = vmatprep.subr.bf16.mxu0 0
    %264 = vmatpush1.bf16.msra.mxu0 0
    %265 = vmatprep.subr.bf16.mxu0 0
    %266 = vmatpush1.bf16.msra.mxu0 0
    %267 = vmatprep.subr.bf16.mxu0 0
    %268 = vmatpush1.bf16.msra.mxu0 0
    %269 = vmatprep.subr.bf16.mxu0 0
    %270 = vmatpush1.bf16.msra.mxu0 0
    %271 = vmatprep.subr.bf16.mxu0 0
    %272 = vmatpush1.bf16.msra.mxu0 0
    %273 = vmatprep.subr.bf16.mxu0 0
    %274 = vmatpush1.bf16.msra.mxu0 0
    %275 = vmatprep.mubr.bf16.mxu0 0
    %276 = vmatmul.mubr.bf16.gmra.mrb[0].mxu0 %v241
    %v277 = vpop.f32.mrb[0].mxu0
    %v278 = vadd.f32 %v238, %v277
    %v279 = vpop.f32.mrb[0].mxu0
    %v280 = vpop.f32.mrb[0].mxu0
    %v281 = vpop.f32.mrb[0].mxu0
    %282 = vdwg.mxu0
    %283 = vst [vmem:[#allocation2] sm:$0xff] %v278
    // Predicated region
    $region30: #{tpu_custom_call.1} parent=1 // pred_check
      _
    $region31: #{tpu_custom_call.1} parent=1 // pred_check_branch
      %285 = sbr.rel (0) target = $region33
    $region32: #{tpu_custom_call.1} parent=1 // pred_region
      %s287 = ssub.s32 128, 128
      %288 = vsyncadd [#allocation3], %s287
      %s290 = sshll.u32 [#allocation2], 4
      %s291 = int_to_ptr.vmem [resolvable:$true] %s290
      %293 = dma.vmem_to_hbm [thread:$0]  %s291, 128, %s7, [#allocation3]
    $region33: #{tpu_custom_call.1} parent=1 // pred_fallthru
      _
    // Predicated region
    $region34: #{tpu_custom_call.1} parent=1 // pred_check
      _
    $region35: #{tpu_custom_call.1} parent=1 // pred_check_branch
      %295 = sbr.rel (0) target = $region37
    $region36: #{tpu_custom_call.1} parent=1 // pred_region
      %296 = dma.done [#allocation3], 128
    $region37: #{tpu_custom_call.1} parent=1 // pred_fallthru
      _
    %297 = vsyncpa [#allocation3], 1

</llo_original>
